<compile_context>
chip_gen: v7x
topology: tpu7x:2x2x1
jax: 0.10.0
libtpu: 0.0.40
codegen_flags: <defaults>
</compile_context>

<pallas_src>
import functools

import jax
import jax.numpy as jnp
from jax.experimental import pallas as pl
from jax.experimental.pallas import tpu as pltpu

HIDDEN = 128
LANE = 128      # TPU lane width (last-dim tiling unit)
SUBLANE = 8     # TPU sublane width (second-to-last-dim tiling unit)


def _round_up(n, m):
    return ((n + m - 1) // m) * m


def qnetwork_kernel(x_ref,
                    w1_ref, b1_ref,
                    w2_ref, b2_ref,
                    w3_ref, b3_ref,
                    w4_ref, b4_ref,
                    o_ref):
    """Fused 4-layer MLP. bf16 matmul inputs, f32 accumulation / bias / ReLU."""
    h = x_ref[...].astype(jnp.bfloat16)

    h = jnp.dot(h, w1_ref[...], preferred_element_type=jnp.float32) + b1_ref[...]
    h = jnp.maximum(h, 0.0).astype(jnp.bfloat16)

    h = jnp.dot(h, w2_ref[...], preferred_element_type=jnp.float32) + b2_ref[...]
    h = jnp.maximum(h, 0.0).astype(jnp.bfloat16)

    h = jnp.dot(h, w3_ref[...], preferred_element_type=jnp.float32) + b3_ref[...]
    h = jnp.maximum(h, 0.0).astype(jnp.bfloat16)

    out = jnp.dot(h, w4_ref[...], preferred_element_type=jnp.float32) + b4_ref[...]
    o_ref[...] = out.astype(o_ref.dtype)


def prepare_params(params):
    """One-time preprocessing: cast weights to bf16, lane-pad the final layer.

    w4/b4 are zero-padded out to a multiple of 128 lanes so the kernel's output
    block is lane-dense (unmasked vector stores, full MXU columns); the padded
    columns are zeros and get sliced off in the wrapper.
    """
    prepped = {}
    for i in (1, 2, 3, 4):
        w = params[f"w{i}"].astype(jnp.bfloat16)
        b = params[f"b{i}"].astype(jnp.float32).reshape(1, -1)
        if i == 4:
            d_out = w.shape[1]
            d_pad = _round_up(d_out, LANE)
            if d_pad != d_out:
                w = jnp.pad(w, ((0, 0), (0, d_pad - d_out)))
                b = jnp.pad(b, ((0, 0), (0, d_pad - d_out)))
        prepped[f"w{i}"] = w
        prepped[f"b{i}"] = b
    return prepped


@functools.partial(jax.jit, static_argnames=("tile_b",))
def _qnetwork_padded_forward(x, prepped, *, tile_b):
    B, D_in = x.shape
    D_out_pad = prepped["w4"].shape[1]

    # Large batch tile for MXU-row utilization; shrink for tiny batches so we
    # don't pad e.g. 2 -> 128 rows.  Keep it a multiple of the 8-row sublane.
    tile = min(tile_b, _round_up(B, SUBLANE))
    B_pad = _round_up(B, tile)
    if B_pad != B:  # only materialize a padded copy of x when strictly needed
        x = jnp.pad(x, ((0, B_pad - B), (0, 0)))

    grid = (B_pad // tile,)

    def batch_map(i):
        return (i, 0)

    def whole_map(i):
        return (0, 0)

    # Weights/biases: whole-array blocks, resident in VMEM across every grid step
    # (~150 KB total in bf16 -> far under scoped VMEM limits on v5e/v6e/v7x).
    w_specs = [pl.BlockSpec(prepped[name].shape, whole_map)
               for name in ("w1", "b1", "w2", "b2", "w3", "b3", "w4", "b4")]

    out = pl.pallas_call(
        qnetwork_kernel,
        out_shape=jax.ShapeDtypeStruct((B_pad, D_out_pad), jnp.float32),
        grid=grid,
        in_specs=[pl.BlockSpec((tile, D_in), batch_map)] + w_specs,
        out_specs=pl.BlockSpec((tile, D_out_pad), batch_map),
        compiler_params=pltpu.CompilerParams(
            dimension_semantics=("parallel",)),
    )(x,
      prepped["w1"], prepped["b1"],
      prepped["w2"], prepped["b2"],
      prepped["w3"], prepped["b3"],
      prepped["w4"], prepped["b4"])
    return out


def qnetwork_forward(x, prepped, output_dim, *, tile_b=128):
    """x: [B, input_dim] float32.  prepped: output of prepare_params."""
    out = _qnetwork_padded_forward(x, prepped, tile_b=tile_b)
    return out[:x.shape[0], :output_dim]


def init_params(key, input_dim, output_dim):
    """Deterministic synthetic init (PyTorch-Linear-like uniform bounds), f32."""
    dims = [(input_dim, HIDDEN), (HIDDEN, HIDDEN), (HIDDEN, HIDDEN), (HIDDEN, output_dim)]
    params = {}
    keys = jax.random.split(key, 2 * len(dims))
    for i, (d_in, d_out) in enumerate(dims):
        bound = 1.0 / jnp.sqrt(jnp.float32(d_in))
        w = jax.random.uniform(keys[2 * i], (d_in, d_out), jnp.float32, -bound, bound)
        b = jax.random.uniform(keys[2 * i + 1], (1, d_out), jnp.float32, -bound, bound)
        params[f"w{i + 1}"] = w
        params[f"b{i + 1}"] = b
    return params


def qnetwork_reference(x, params):
    """Pure-JAX f32 reference matching the PyTorch module semantics."""
    h = jnp.maximum(x @ params["w1"] + params["b1"], 0.0)
    h = jnp.maximum(h @ params["w2"] + params["b2"], 0.0)
    h = jnp.maximum(h @ params["w3"] + params["b3"], 0.0)
    return h @ params["w4"] + params["b4"]


if __name__ == "__main__":
    key = jax.random.PRNGKey(0)
    k_x, k_p = jax.random.split(key)

    batch = 2
    input_dim = 32
    output_dim = 8

    x = jax.random.normal(k_x, (batch, input_dim), jnp.float32)
    params = init_params(k_p, input_dim, output_dim)
    prepped = prepare_params(params)

    out = qnetwork_forward(x, prepped, output_dim)
    jax.block_until_ready(out)

    ref = qnetwork_reference(x, params)
    assert out.shape == (batch, output_dim)
    # bf16 matmul inputs (f32 accumulation) vs f32 reference -> loose tolerance.
    assert jnp.allclose(out, ref, atol=5e-2, rtol=5e-2)

    print("KERNEL_OK")
</pallas_src>

<mosaic_0001>
module attributes {stable_mosaic.version = 11 : i64} {
  func.func @qnetwork_kernel(%arg0: i32, %arg1: memref<8x32xf32, #tpu.memory_space<vmem>>, %arg2: memref<32x128xbf16, #tpu.memory_space<vmem>>, %arg3: memref<1x128xf32, #tpu.memory_space<vmem>>, %arg4: memref<128x128xbf16, #tpu.memory_space<vmem>>, %arg5: memref<1x128xf32, #tpu.memory_space<vmem>>, %arg6: memref<128x128xbf16, #tpu.memory_space<vmem>>, %arg7: memref<1x128xf32, #tpu.memory_space<vmem>>, %arg8: memref<128x128xbf16, #tpu.memory_space<vmem>>, %arg9: memref<1x128xf32, #tpu.memory_space<vmem>>, %arg10: memref<8x128xf32, #tpu.memory_space<vmem>>) attributes {dimension_semantics = [#tpu.dimension_semantics<parallel>], iteration_bounds = array<i64: 1>, scalar_prefetch = 0 : i64, scratch_operands = 0 : i64, tpu.core_type = #tpu.core_type<tc>, window_params = [{transform_indices = @transform_0, window_bounds = array<i64: 8, 32>}, {pipeline_mode = #tpu.pipeline_mode<synchronous>, transform_indices = @transform_1, window_bounds = array<i64: 32, 128>}, {pipeline_mode = #tpu.pipeline_mode<synchronous>, transform_indices = @transform_2, window_bounds = array<i64: 1, 128>}, {pipeline_mode = #tpu.pipeline_mode<synchronous>, transform_indices = @transform_3, window_bounds = array<i64: 128, 128>}, {pipeline_mode = #tpu.pipeline_mode<synchronous>, transform_indices = @transform_4, window_bounds = array<i64: 1, 128>}, {pipeline_mode = #tpu.pipeline_mode<synchronous>, transform_indices = @transform_5, window_bounds = array<i64: 128, 128>}, {pipeline_mode = #tpu.pipeline_mode<synchronous>, transform_indices = @transform_6, window_bounds = array<i64: 1, 128>}, {pipeline_mode = #tpu.pipeline_mode<synchronous>, transform_indices = @transform_7, window_bounds = array<i64: 128, 128>}, {pipeline_mode = #tpu.pipeline_mode<synchronous>, transform_indices = @transform_8, window_bounds = array<i64: 1, 128>}, {transform_indices = @transform_9, window_bounds = array<i64: 8, 128>}]} {
    %c0 = arith.constant 0 : index
    %c0_0 = arith.constant 0 : index
    %0 = vector.load %arg1[%c0, %c0_0] : memref<8x32xf32, #tpu.memory_space<vmem>>, vector<8x32xf32>
    %1 = arith.truncf %0 : vector<8x32xf32> to vector<8x32xbf16>
    %c0_1 = arith.constant 0 : index
    %c0_2 = arith.constant 0 : index
    %2 = vector.load %arg2[%c0_1, %c0_2] : memref<32x128xbf16, #tpu.memory_space<vmem>>, vector<32x128xbf16>
    %cst = arith.constant dense<0.000000e+00> : vector<8x128xf32>
    %3 = tpu.matmul %1, %2, %cst {dimension_numbers = #tpu.dot_dimension_numbers<[1], [0], [0], [1], [0, 0, 1, 1], [], []>} : vector<8x32xbf16>, vector<32x128xbf16>, vector<8x128xf32> -> vector<8x128xf32>
    %c0_3 = arith.constant 0 : index
    %c0_4 = arith.constant 0 : index
    %4 = vector.load %arg3[%c0_3, %c0_4] : memref<1x128xf32, #tpu.memory_space<vmem>>, vector<1x128xf32>
    %5 = vector.broadcast %4 : vector<1x128xf32> to vector<8x128xf32>
    %6 = arith.addf %3, %5 : vector<8x128xf32>
    %cst_5 = arith.constant 0.000000e+00 : f32
    %7 = vector.broadcast %cst_5 : f32 to vector<8x128xf32>
    %8 = arith.maximumf %6, %7 : vector<8x128xf32>
    %9 = arith.truncf %8 : vector<8x128xf32> to vector<8x128xbf16>
    %c0_6 = arith.constant 0 : index
    %c0_7 = arith.constant 0 : index
    %10 = vector.load %arg4[%c0_6, %c0_7] : memref<128x128xbf16, #tpu.memory_space<vmem>>, vector<128x128xbf16>
    %cst_8 = arith.constant dense<0.000000e+00> : vector<8x128xf32>
    %11 = tpu.matmul %9, %10, %cst_8 {dimension_numbers = #tpu.dot_dimension_numbers<[1], [0], [0], [1], [0, 0, 1, 1], [], []>} : vector<8x128xbf16>, vector<128x128xbf16>, vector<8x128xf32> -> vector<8x128xf32>
    %c0_9 = arith.constant 0 : index
    %c0_10 = arith.constant 0 : index
    %12 = vector.load %arg5[%c0_9, %c0_10] : memref<1x128xf32, #tpu.memory_space<vmem>>, vector<1x128xf32>
    %13 = vector.broadcast %12 : vector<1x128xf32> to vector<8x128xf32>
    %14 = arith.addf %11, %13 : vector<8x128xf32>
    %cst_11 = arith.constant 0.000000e+00 : f32
    %15 = vector.broadcast %cst_11 : f32 to vector<8x128xf32>
    %16 = arith.maximumf %14, %15 : vector<8x128xf32>
    %17 = arith.truncf %16 : vector<8x128xf32> to vector<8x128xbf16>
    %c0_12 = arith.constant 0 : index
    %c0_13 = arith.constant 0 : index
    %18 = vector.load %arg6[%c0_12, %c0_13] : memref<128x128xbf16, #tpu.memory_space<vmem>>, vector<128x128xbf16>
    %cst_14 = arith.constant dense<0.000000e+00> : vector<8x128xf32>
    %19 = tpu.matmul %17, %18, %cst_14 {dimension_numbers = #tpu.dot_dimension_numbers<[1], [0], [0], [1], [0, 0, 1, 1], [], []>} : vector<8x128xbf16>, vector<128x128xbf16>, vector<8x128xf32> -> vector<8x128xf32>
    %c0_15 = arith.constant 0 : index
    %c0_16 = arith.constant 0 : index
    %20 = vector.load %arg7[%c0_15, %c0_16] : memref<1x128xf32, #tpu.memory_space<vmem>>, vector<1x128xf32>
    %21 = vector.broadcast %20 : vector<1x128xf32> to vector<8x128xf32>
    %22 = arith.addf %19, %21 : vector<8x128xf32>
    %cst_17 = arith.constant 0.000000e+00 : f32
    %23 = vector.broadcast %cst_17 : f32 to vector<8x128xf32>
    %24 = arith.maximumf %22, %23 : vector<8x128xf32>
    %25 = arith.truncf %24 : vector<8x128xf32> to vector<8x128xbf16>
    %c0_18 = arith.constant 0 : index
    %c0_19 = arith.constant 0 : index
    %26 = vector.load %arg8[%c0_18, %c0_19] : memref<128x128xbf16, #tpu.memory_space<vmem>>, vector<128x128xbf16>
    %cst_20 = arith.constant dense<0.000000e+00> : vector<8x128xf32>
    %27 = tpu.matmul %25, %26, %cst_20 {dimension_numbers = #tpu.dot_dimension_numbers<[1], [0], [0], [1], [0, 0, 1, 1], [], []>} : vector<8x128xbf16>, vector<128x128xbf16>, vector<8x128xf32> -> vector<8x128xf32>
    %c0_21 = arith.constant 0 : index
    %c0_22 = arith.constant 0 : index
    %28 = vector.load %arg9[%c0_21, %c0_22] : memref<1x128xf32, #tpu.memory_space<vmem>>, vector<1x128xf32>
    %29 = vector.broadcast %28 : vector<1x128xf32> to vector<8x128xf32>
    %30 = arith.addf %27, %29 : vector<8x128xf32>
    %c0_23 = arith.constant 0 : index
    %c0_24 = arith.constant 0 : index
    %31 = vector.load %arg10[%c0_23, %c0_24] : memref<8x128xf32, #tpu.memory_space<vmem>>, vector<8x128xf32>
    tpu.vector_store %arg10[%c0_23, %c0_24], %30 {strides = array<i32>} : memref<8x128xf32, #tpu.memory_space<vmem>>, vector<8x128xf32>,
    return
  }
  func.func @transform_0(%arg0: i32) -> (i32, i32) {
    %c0_i32 = arith.constant 0 : i32
    %c0_i32_0 = arith.constant 0 : i32
    return %arg0, %c0_i32 : i32, i32
  }
  func.func @transform_1(%arg0: i32) -> (i32, i32) {
    %c0_i32 = arith.constant 0 : i32
    %c0_i32_0 = arith.constant 0 : i32
    %c0_i32_1 = arith.constant 0 : i32
    return %c0_i32, %c0_i32_0 : i32, i32
  }
  func.func @transform_2(%arg0: i32) -> (i32, i32) {
    %c0_i32 = arith.constant 0 : i32
    %c0_i32_0 = arith.constant 0 : i32
    %c0_i32_1 = arith.constant 0 : i32
    return %c0_i32, %c0_i32_0 : i32, i32
  }
  func.func @transform_3(%arg0: i32) -> (i32, i32) {
    %c0_i32 = arith.constant 0 : i32
    %c0_i32_0 = arith.constant 0 : i32
    %c0_i32_1 = arith.constant 0 : i32
    return %c0_i32, %c0_i32_0 : i32, i32
  }
  func.func @transform_4(%arg0: i32) -> (i32, i32) {
    %c0_i32 = arith.constant 0 : i32
    %c0_i32_0 = arith.constant 0 : i32
    %c0_i32_1 = arith.constant 0 : i32
    return %c0_i32, %c0_i32_0 : i32, i32
  }
  func.func @transform_5(%arg0: i32) -> (i32, i32) {
    %c0_i32 = arith.constant 0 : i32
    %c0_i32_0 = arith.constant 0 : i32
    %c0_i32_1 = arith.constant 0 : i32
    return %c0_i32, %c0_i32_0 : i32, i32
  }
  func.func @transform_6(%arg0: i32) -> (i32, i32) {
    %c0_i32 = arith.constant 0 : i32
    %c0_i32_0 = arith.constant 0 : i32
    %c0_i32_1 = arith.constant 0 : i32
    return %c0_i32, %c0_i32_0 : i32, i32
  }
  func.func @transform_7(%arg0: i32) -> (i32, i32) {
    %c0_i32 = arith.constant 0 : i32
    %c0_i32_0 = arith.constant 0 : i32
    %c0_i32_1 = arith.constant 0 : i32
    return %c0_i32, %c0_i32_0 : i32, i32
  }
  func.func @transform_8(%arg0: i32) -> (i32, i32) {
    %c0_i32 = arith.constant 0 : i32
    %c0_i32_0 = arith.constant 0 : i32
    %c0_i32_1 = arith.constant 0 : i32
    return %c0_i32, %c0_i32_0 : i32, i32
  }
  func.func @transform_9(%arg0: i32) -> (i32, i32) {
    %c0_i32 = arith.constant 0 : i32
    %c0_i32_0 = arith.constant 0 : i32
    return %arg0, %c0_i32 : i32, i32
  }
}

</mosaic_0001>

<llo_original>
// kernel: _qnetwork_padded_forward.1
$region0: #{_qnetwork_padded_forward.1}
  #allocation0 [shape = 'u32[]', space=smem, size = 0x4, offset = 0x4, fixed_abs, tag = 'smem constant byte address 0x4 - core index']
  #allocation1 [shape = 'u32[144,128]{1,0:T(1,128)}', space=vmem, size = 0x12000, scoped, tag = 'internal scratch']
  %s0 = inlined_call_operand.vmem [shape: f32[8,32], index: 0, kind: input, shape index: {}]
  %s1 = inlined_call_operand.vmem [shape: bf16[32,128], index: 1, kind: input, shape index: {}]
  %s2 = inlined_call_operand.vmem [shape: f32[1,128], index: 2, kind: input, shape index: {}]
  %s3 = inlined_call_operand.hbm [shape: bf16[128,128], index: 3, kind: input, shape index: {}]
  %s4 = inlined_call_operand.vmem [shape: f32[1,128], index: 4, kind: input, shape index: {}]
  %s5 = inlined_call_operand.hbm [shape: bf16[128,128], index: 5, kind: input, shape index: {}]
  %s6 = inlined_call_operand.vmem [shape: f32[1,128], index: 6, kind: input, shape index: {}]
  %s7 = inlined_call_operand.hbm [shape: bf16[128,128], index: 7, kind: input, shape index: {}]
  %s8 = inlined_call_operand.vmem [shape: f32[1,128], index: 8, kind: input, shape index: {}]
  %s9 = inlined_call_operand.hbm [shape: f32[8,128], index: 9, kind: output, shape index: {}]
  %s10 = sld [smem:[#allocation0]]
  $region58: #{_qnetwork_padded_forward.1} parent=0
    _
  %s12 = ssub.s32 1, %s10
  %s13 = scalar_select 0, %s12, %s10
  $region1: #{_qnetwork_padded_forward.1} parent=0
    #allocation2 [shape = 'u8[32768]{0}', space=vmem, size = 0x8000, scoped, tag = 'input window, operand 3, single buffered']
    #allocation3 [shape = 's32[1]{0}', space=sflag, size = 0x4, scoped, tag = 'scoped memory for _qnetwork_padded_forward.1']
    #allocation4 [shape = 's32[1]{0}', space=sflag, size = 0x4, scoped, tag = 'scoped memory for _qnetwork_padded_forward.1']
    #allocation5 [shape = 'u8[32768]{0}', space=vmem, size = 0x8000, scoped, tag = 'input window, operand 5, single buffered']
    #allocation6 [shape = 's32[1]{0}', space=sflag, size = 0x4, scoped, tag = 'scoped memory for _qnetwork_padded_forward.1']
    #allocation7 [shape = 'u8[32768]{0}', space=vmem, size = 0x8000, scoped, tag = 'input window, operand 7, single buffered']
    #allocation8 [shape = 'u8[4096]{0}', space=vmem, size = 0x1000, scoped, tag = 'output window, operand 0, single buffered']
    %14 = vsyncpa [#allocation3], 0
    %15 = vsyncpa [#allocation6], 0
    %16 = vsyncpa [#allocation4], 0
    // Predicated region
    $region2: #{_qnetwork_padded_forward.1} parent=1 // pred_check
      _
    $region3: #{_qnetwork_padded_forward.1} parent=1 // pred_check_branch
      %18 = sbr.rel (0) target = $region5
    $region4: #{_qnetwork_padded_forward.1} parent=1 // pred_region
      _
    $region5: #{_qnetwork_padded_forward.1} parent=1 // pred_fallthru
      _
    // Predicated region
    $region6: #{_qnetwork_padded_forward.1} parent=1 // pred_check
      _
    $region7: #{_qnetwork_padded_forward.1} parent=1 // pred_check_branch
      %20 = sbr.rel (0) target = $region9
    $region8: #{_qnetwork_padded_forward.1} parent=1 // pred_region
      _
    $region9: #{_qnetwork_padded_forward.1} parent=1 // pred_fallthru
      _
    // Predicated region
    $region10: #{_qnetwork_padded_forward.1} parent=1 // pred_check
      _
    $region11: #{_qnetwork_padded_forward.1} parent=1 // pred_check_branch
      %22 = sbr.rel (0) target = $region13
    $region12: #{_qnetwork_padded_forward.1} parent=1 // pred_region
      _
    $region13: #{_qnetwork_padded_forward.1} parent=1 // pred_fallthru
      _
    // Predicated region
    $region14: #{_qnetwork_padded_forward.1} parent=1 // pred_check
      _
    $region15: #{_qnetwork_padded_forward.1} parent=1 // pred_check_branch
      %24 = sbr.rel (0) target = $region17
    $region16: #{_qnetwork_padded_forward.1} parent=1 // pred_region
      %s26 = ssub.s32 1024, 1024
      %27 = vsyncadd [#allocation3], %s26
      %s28 = sshll.u32 [#allocation2], 4
      %s29 = int_to_ptr.vmem [resolvable:$true] %s28
      %34 = dma.hbm_to_vmem [thread:$0]  %s3, 1024, %s29, [#allocation3], 64, 64, 4
    $region17: #{_qnetwork_padded_forward.1} parent=1 // pred_fallthru
      _
    // Predicated region
    $region18: #{_qnetwork_padded_forward.1} parent=1 // pred_check
      _
    $region19: #{_qnetwork_padded_forward.1} parent=1 // pred_check_branch
      %36 = sbr.rel (0) target = $region21
    $region20: #{_qnetwork_padded_forward.1} parent=1 // pred_region
      _
    $region21: #{_qnetwork_padded_forward.1} parent=1 // pred_fallthru
      _
    // Predicated region
    $region22: #{_qnetwork_padded_forward.1} parent=1 // pred_check
      _
    $region23: #{_qnetwork_padded_forward.1} parent=1 // pred_check_branch
      %38 = sbr.rel (0) target = $region25
    $region24: #{_qnetwork_padded_forward.1} parent=1 // pred_region
      %s40 = ssub.s32 1024, 1024
      %41 = vsyncadd [#allocation6], %s40
      %s42 = sshll.u32 [#allocation5], 4
      %s43 = int_to_ptr.vmem [resolvable:$true] %s42
      %48 = dma.hbm_to_vmem [thread:$0]  %s5, 1024, %s43, [#allocation6], 64, 64, 4
    $region25: #{_qnetwork_padded_forward.1} parent=1 // pred_fallthru
      _
    // Predicated region
    $region26: #{_qnetwork_padded_forward.1} parent=1 // pred_check
      _
    $region27: #{_qnetwork_padded_forward.1} parent=1 // pred_check_branch
      %50 = sbr.rel (0) target = $region29
    $region28: #{_qnetwork_padded_forward.1} parent=1 // pred_region
      _
    $region29: #{_qnetwork_padded_forward.1} parent=1 // pred_fallthru
      _
    // Predicated region
    $region30: #{_qnetwork_padded_forward.1} parent=1 // pred_check
      _
    $region31: #{_qnetwork_padded_forward.1} parent=1 // pred_check_branch
      %52 = sbr.rel (0) target = $region33
    $region32: #{_qnetwork_padded_forward.1} parent=1 // pred_region
      %s54 = ssub.s32 1024, 1024
      %55 = vsyncadd [#allocation6], %s54
      %s56 = sshll.u32 [#allocation7], 4
      %s57 = int_to_ptr.vmem [resolvable:$true] %s56
      %62 = dma.hbm_to_vmem [thread:$0]  %s7, 1024, %s57, [#allocation6], 64, 64, 4
    $region33: #{_qnetwork_padded_forward.1} parent=1 // pred_fallthru
      _
    // Predicated region
    $region34: #{_qnetwork_padded_forward.1} parent=1 // pred_check
      _
    $region35: #{_qnetwork_padded_forward.1} parent=1 // pred_check_branch
      %64 = sbr.rel (0) target = $region37
    $region36: #{_qnetwork_padded_forward.1} parent=1 // pred_region
      _
    $region37: #{_qnetwork_padded_forward.1} parent=1 // pred_fallthru
      _
    // Predicated region
    $region38: #{_qnetwork_padded_forward.1} parent=1 // pred_check
      _
    $region39: #{_qnetwork_padded_forward.1} parent=1 // pred_check_branch
      %66 = sbr.rel (0) target = $region41
    $region40: #{_qnetwork_padded_forward.1} parent=1 // pred_region
      %67 = dma.done [#allocation3], 1024
    $region41: #{_qnetwork_padded_forward.1} parent=1 // pred_fallthru
      _
    // Predicated region
    $region42: #{_qnetwork_padded_forward.1} parent=1 // pred_check
      _
    $region43: #{_qnetwork_padded_forward.1} parent=1 // pred_check_branch
      %69 = sbr.rel (0) target = $region45
    $region44: #{_qnetwork_padded_forward.1} parent=1 // pred_region
      %70 = dma.done [#allocation6], 1024
    $region45: #{_qnetwork_padded_forward.1} parent=1 // pred_fallthru
      _
    // Predicated region
    $region46: #{_qnetwork_padded_forward.1} parent=1 // pred_check
      _
    $region47: #{_qnetwork_padded_forward.1} parent=1 // pred_check_branch
      %72 = sbr.rel (0) target = $region49
    $region48: #{_qnetwork_padded_forward.1} parent=1 // pred_region
      %73 = dma.done [#allocation6], 1024
    $region49: #{_qnetwork_padded_forward.1} parent=1 // pred_fallthru
      _
    %v75 = vld [vmem:[%s0] sm:$0xff]
    %v76 = vpack.c.bf16 %v75, %v75
    %v77 = vld [vmem:[%s1] sm:$0xf]
    %v78 = vld [vmem:[%s1 + $0x4] sm:$0xf]
    %v79 = vld [vmem:[%s1 + $0x8] sm:$0xf]
    %v80 = vld [vmem:[%s1 + $0xc] sm:$0xf]
    %v81 = vld [vmem:[%s2] sm:$0x1]
    %v83 = vlaneseq
    %v84 = vshrl.u32 %v83, 7
    %v85 = vsub.s32 0, %v84
    %v86 = vrot.slane %v81, %v85
    %v92 = vunpack.c.l.b16 %v77
    %v93 = vunpack.c.l.b16 %v78
    %v94 = vunpack.c.l.b16 %v79
    %v95 = vunpack.c.l.b16 %v80
    %v96 = vpack.c.b16 %v93, %v92
    %v97 = vpack.c.b16 %v95, %v94
    %vm100 = vcmask 261120
    %v102 = vsel %vm100, %v76, 0
    %104 = vmatprep.subr.bf16.mxu0 0
    %105 = vmatpush1.bf16.msra.mxu0 %v96
    %106 = vmatprep.subr.bf16.mxu0 0
    %107 = vmatpush1.bf16.msra.mxu0 %v97
    %108 = vmatprep.subr.bf16.mxu0 0
    %109 = vmatpush1.bf16.msra.mxu0 0
    %110 = vmatprep.subr.bf16.mxu0 0
    %111 = vmatpush1.bf16.msra.mxu0 0
    %112 = vmatprep.subr.bf16.mxu0 0
    %113 = vmatpush1.bf16.msra.mxu0 0
    %114 = vmatprep.subr.bf16.mxu0 0
    %115 = vmatpush1.bf16.msra.mxu0 0
    %116 = vmatprep.subr.bf16.mxu0 0
    %117 = vmatpush1.bf16.msra.mxu0 0
    %118 = vmatprep.subr.bf16.mxu0 0
    %119 = vmatpush1.bf16.msra.mxu0 0
    %120 = vmatprep.subr.bf16.mxu0 0
    %121 = vmatpush1.bf16.msra.mxu0 0
    %122 = vmatprep.subr.bf16.mxu0 0
    %123 = vmatpush1.bf16.msra.mxu0 0
    %124 = vmatprep.subr.bf16.mxu0 0
    %125 = vmatpush1.bf16.msra.mxu0 0
    %126 = vmatprep.subr.bf16.mxu0 0
    %127 = vmatpush1.bf16.msra.mxu0 0
    %128 = vmatprep.subr.bf16.mxu0 0
    %129 = vmatpush1.bf16.msra.mxu0 0
    %130 = vmatprep.subr.bf16.mxu0 0
    %131 = vmatpush1.bf16.msra.mxu0 0
    %132 = vmatprep.subr.bf16.mxu0 0
    %133 = vmatpush1.bf16.msra.mxu0 0
    %134 = vmatprep.subr.bf16.mxu0 0
    %135 = vmatpush1.bf16.msra.mxu0 0
    %136 = vmatprep.mubr.bf16.mxu0 0
    %137 = vmatmul.mubr.bf16.gmra.mrb[0].mxu0 %v102
    %v138 = vpop.f32.mrb[0].mxu0
    %v139 = vadd.f32 %v86, %v138
    %v140 = vpop.f32.mrb[0].mxu0
    %v141 = vpop.f32.mrb[0].mxu0
    %v142 = vpop.f32.mrb[0].mxu0
    %143 = vdwg.mxu0
    %v144 = vmax.f32 %v139, 0.0
    %v145 = vpack.c.bf16 %v144, %v144
    %v146 = vld [vmem:[#allocation2] sm:$0xf]
    %v147 = vld [vmem:[#allocation2 + $0x4] sm:$0xf]
    %v148 = vld [vmem:[#allocation2 + $0x8] sm:$0xf]
    %v149 = vld [vmem:[#allocation2 + $0xc] sm:$0xf]
    %v150 = vld [vmem:[#allocation2 + $0x10] sm:$0xf]
    %v151 = vld [vmem:[#allocation2 + $0x14] sm:$0xf]
    %v152 = vld [vmem:[#allocation2 + $0x18] sm:$0xf]
    %v153 = vld [vmem:[#allocation2 + $0x1c] sm:$0xf]
    %v154 = vld [vmem:[#allocation2 + $0x20] sm:$0xf]
    %v155 = vld [vmem:[#allocation2 + $0x24] sm:$0xf]
    %v156 = vld [vmem:[#allocation2 + $0x28] sm:$0xf]
    %v157 = vld [vmem:[#allocation2 + $0x2c] sm:$0xf]
    %v158 = vld [vmem:[#allocation2 + $0x30] sm:$0xf]
    %v159 = vld [vmem:[#allocation2 + $0x34] sm:$0xf]
    %v160 = vld [vmem:[#allocation2 + $0x38] sm:$0xf]
    %v161 = vld [vmem:[#allocation2 + $0x3c] sm:$0xf]
    %v162 = vld [vmem:[%s4] sm:$0x1]
    %v164 = vlaneseq
    %v165 = vshrl.u32 %v164, 7
    %v166 = vsub.s32 0, %v165
    %v167 = vrot.slane %v162, %v166
    %v185 = vunpack.c.l.b16 %v146
    %v186 = vunpack.c.l.b16 %v147
    %v187 = vunpack.c.l.b16 %v148
    %v188 = vunpack.c.l.b16 %v149
    %v189 = vunpack.c.l.b16 %v150
    %v190 = vunpack.c.l.b16 %v151
    %v191 = vunpack.c.l.b16 %v152
    %v192 = vunpack.c.l.b16 %v153
    %v193 = vunpack.c.l.b16 %v154
    %v194 = vunpack.c.l.b16 %v155
    %v195 = vunpack.c.l.b16 %v156
    %v196 = vunpack.c.l.b16 %v157
    %v197 = vunpack.c.l.b16 %v158
    %v198 = vunpack.c.l.b16 %v159
    %v199 = vunpack.c.l.b16 %v160
    %v200 = vunpack.c.l.b16 %v161
    %v201 = vpack.c.b16 %v186, %v185
    %v202 = vpack.c.b16 %v188, %v187
    %v203 = vpack.c.b16 %v190, %v189
    %v204 = vpack.c.b16 %v192, %v191
    %v205 = vpack.c.b16 %v194, %v193
    %v206 = vpack.c.b16 %v196, %v195
    %v207 = vpack.c.b16 %v198, %v197
    %v208 = vpack.c.b16 %v200, %v199
    %217 = vmatprep.subr.bf16.mxu0 0
    %218 = vmatpush1.bf16.msra.mxu0 %v201
    %219 = vmatprep.subr.bf16.mxu0 0
    %220 = vmatpush1.bf16.msra.mxu0 %v202
    %221 = vmatprep.subr.bf16.mxu0 0
    %222 = vmatpush1.bf16.msra.mxu0 %v203
    %223 = vmatprep.subr.bf16.mxu0 0
    %224 = vmatpush1.bf16.msra.mxu0 %v204
    %225 = vmatprep.subr.bf16.mxu0 0
    %226 = vmatpush1.bf16.msra.mxu0 %v205
    %227 = vmatprep.subr.bf16.mxu0 0
    %228 = vmatpush1.bf16.msra.mxu0 %v206
    %229 = vmatprep.subr.bf16.mxu0 0
    %230 = vmatpush1.bf16.msra.mxu0 %v207
    %231 = vmatprep.subr.bf16.mxu0 0
    %232 = vmatpush1.bf16.msra.mxu0 %v208
    %233 = vmatprep.subr.bf16.mxu0 0
    %234 = vmatpush1.bf16.msra.mxu0 0
    %235 = vmatprep.subr.bf16.mxu0 0
    %236 = vmatpush1.bf16.msra.mxu0 0
    %237 = vmatprep.subr.bf16.mxu0 0
    %238 = vmatpush1.bf16.msra.mxu0 0
    %239 = vmatprep.subr.bf16.mxu0 0
    %240 = vmatpush1.bf16.msra.mxu0 0
    %241 = vmatprep.subr.bf16.mxu0 0
    %242 = vmatpush1.bf16.msra.mxu0 0
    %243 = vmatprep.subr.bf16.mxu0 0
    %244 = vmatpush1.bf16.msra.mxu0 0
    %245 = vmatprep.subr.bf16.mxu0 0
    %246 = vmatpush1.bf16.msra.mxu0 0
    %247 = vmatprep.subr.bf16.mxu0 0
    %248 = vmatpush1.bf16.msra.mxu0 0
    %249 = vmatprep.mubr.bf16.mxu0 0
    %250 = vmatmul.mubr.bf16.gmra.mrb[0].mxu0 %v145
    %v251 = vpop.f32.mrb[0].mxu0
    %v252 = vadd.f32 %v167, %v251
    %v253 = vpop.f32.mrb[0].mxu0
    %v254 = vpop.f32.mrb[0].mxu0
    %v255 = vpop.f32.mrb[0].mxu0
    %256 = vdwg.mxu0
    %v257 = vmax.f32 %v252, 0.0
    %v258 = vpack.c.bf16 %v257, %v257
    %v259 = vld [vmem:[#allocation5] sm:$0xf]
    %v260 = vld [vmem:[#allocation5 + $0x4] sm:$0xf]
    %v261 = vld [vmem:[#allocation5 + $0x8] sm:$0xf]
    %v262 = vld [vmem:[#allocation5 + $0xc] sm:$0xf]
    %v263 = vld [vmem:[#allocation5 + $0x10] sm:$0xf]
    %v264 = vld [vmem:[#allocation5 + $0x14] sm:$0xf]
    %v265 = vld [vmem:[#allocation5 + $0x18] sm:$0xf]
    %v266 = vld [vmem:[#allocation5 + $0x1c] sm:$0xf]
    %v267 = vld [vmem:[#allocation5 + $0x20] sm:$0xf]
    %v268 = vld [vmem:[#allocation5 + $0x24] sm:$0xf]
    %v269 = vld [vmem:[#allocation5 + $0x28] sm:$0xf]
    %v270 = vld [vmem:[#allocation5 + $0x2c] sm:$0xf]
    %v271 = vld [vmem:[#allocation5 + $0x30] sm:$0xf]
    %v272 = vld [vmem:[#allocation5 + $0x34] sm:$0xf]
    %v273 = vld [vmem:[#allocation5 + $0x38] sm:$0xf]
    %v274 = vld [vmem:[#allocation5 + $0x3c] sm:$0xf]
    %v275 = vld [vmem:[%s6] sm:$0x1]
    %v277 = vlaneseq
    %v278 = vshrl.u32 %v277, 7
    %v279 = vsub.s32 0, %v278
    %v280 = vrot.slane %v275, %v279
    %v298 = vunpack.c.l.b16 %v259
    %v299 = vunpack.c.l.b16 %v260
    %v300 = vunpack.c.l.b16 %v261
    %v301 = vunpack.c.l.b16 %v262
    %v302 = vunpack.c.l.b16 %v263
    %v303 = vunpack.c.l.b16 %v264
    %v304 = vunpack.c.l.b16 %v265
    %v305 = vunpack.c.l.b16 %v266
    %v306 = vunpack.c.l.b16 %v267
    %v307 = vunpack.c.l.b16 %v268
    %v308 = vunpack.c.l.b16 %v269
    %v309 = vunpack.c.l.b16 %v270
    %v310 = vunpack.c.l.b16 %v271
    %v311 = vunpack.c.l.b16 %v272
    %v312 = vunpack.c.l.b16 %v273
    %v313 = vunpack.c.l.b16 %v274
    %v314 = vpack.c.b16 %v299, %v298
    %v315 = vpack.c.b16 %v301, %v300
    %v316 = vpack.c.b16 %v303, %v302
    %v317 = vpack.c.b16 %v305, %v304
    %v318 = vpack.c.b16 %v307, %v306
    %v319 = vpack.c.b16 %v309, %v308
    %v320 = vpack.c.b16 %v311, %v310
    %v321 = vpack.c.b16 %v313, %v312
    %330 = vmatprep.subr.bf16.mxu0 0
    %331 = vmatpush1.bf16.msra.mxu0 %v314
    %332 = vmatprep.subr.bf16.mxu0 0
    %333 = vmatpush1.bf16.msra.mxu0 %v315
    %334 = vmatprep.subr.bf16.mxu0 0
    %335 = vmatpush1.bf16.msra.mxu0 %v316
    %336 = vmatprep.subr.bf16.mxu0 0
    %337 = vmatpush1.bf16.msra.mxu0 %v317
    %338 = vmatprep.subr.bf16.mxu0 0
    %339 = vmatpush1.bf16.msra.mxu0 %v318
    %340 = vmatprep.subr.bf16.mxu0 0
    %341 = vmatpush1.bf16.msra.mxu0 %v319
    %342 = vmatprep.subr.bf16.mxu0 0
    %343 = vmatpush1.bf16.msra.mxu0 %v320
    %344 = vmatprep.subr.bf16.mxu0 0
    %345 = vmatpush1.bf16.msra.mxu0 %v321
    %346 = vmatprep.subr.bf16.mxu0 0
    %347 = vmatpush1.bf16.msra.mxu0 0
    %348 = vmatprep.subr.bf16.mxu0 0
    %349 = vmatpush1.bf16.msra.mxu0 0
    %350 = vmatprep.subr.bf16.mxu0 0
    %351 = vmatpush1.bf16.msra.mxu0 0
    %352 = vmatprep.subr.bf16.mxu0 0
    %353 = vmatpush1.bf16.msra.mxu0 0
    %354 = vmatprep.subr.bf16.mxu0 0
    %355 = vmatpush1.bf16.msra.mxu0 0
    %356 = vmatprep.subr.bf16.mxu0 0
    %357 = vmatpush1.bf16.msra.mxu0 0
    %358 = vmatprep.subr.bf16.mxu0 0
    %359 = vmatpush1.bf16.msra.mxu0 0
    %360 = vmatprep.subr.bf16.mxu0 0
    %361 = vmatpush1.bf16.msra.mxu0 0
    %362 = vmatprep.mubr.bf16.mxu0 0
    %363 = vmatmul.mubr.bf16.gmra.mrb[0].mxu0 %v258
    %v364 = vpop.f32.mrb[0].mxu0
    %v365 = vadd.f32 %v280, %v364
    %v366 = vpop.f32.mrb[0].mxu0
    %v367 = vpop.f32.mrb[0].mxu0
    %v368 = vpop.f32.mrb[0].mxu0
    %369 = vdwg.mxu0
    %v370 = vmax.f32 %v365, 0.0
    %v371 = vpack.c.bf16 %v370, %v370
    %v372 = vld [vmem:[#allocation7] sm:$0xf]
    %v373 = vld [vmem:[#allocation7 + $0x4] sm:$0xf]
    %v374 = vld [vmem:[#allocation7 + $0x8] sm:$0xf]
    %v375 = vld [vmem:[#allocation7 + $0xc] sm:$0xf]
    %v376 = vld [vmem:[#allocation7 + $0x10] sm:$0xf]
    %v377 = vld [vmem:[#allocation7 + $0x14] sm:$0xf]
    %v378 = vld [vmem:[#allocation7 + $0x18] sm:$0xf]
    %v379 = vld [vmem:[#allocation7 + $0x1c] sm:$0xf]
    %v380 = vld [vmem:[#allocation7 + $0x20] sm:$0xf]
    %v381 = vld [vmem:[#allocation7 + $0x24] sm:$0xf]
    %v382 = vld [vmem:[#allocation7 + $0x28] sm:$0xf]
    %v383 = vld [vmem:[#allocation7 + $0x2c] sm:$0xf]
    %v384 = vld [vmem:[#allocation7 + $0x30] sm:$0xf]
    %v385 = vld [vmem:[#allocation7 + $0x34] sm:$0xf]
    %v386 = vld [vmem:[#allocation7 + $0x38] sm:$0xf]
    %v387 = vld [vmem:[#allocation7 + $0x3c] sm:$0xf]
    %v388 = vld [vmem:[%s8] sm:$0x1]
    %v390 = vlaneseq
    %v391 = vshrl.u32 %v390, 7
    %v392 = vsub.s32 0, %v391
    %v393 = vrot.slane %v388, %v392
    %v411 = vunpack.c.l.b16 %v372
    %v412 = vunpack.c.l.b16 %v373
    %v413 = vunpack.c.l.b16 %v374
    %v414 = vunpack.c.l.b16 %v375
    %v415 = vunpack.c.l.b16 %v376
    %v416 = vunpack.c.l.b16 %v377
    %v417 = vunpack.c.l.b16 %v378
    %v418 = vunpack.c.l.b16 %v379
    %v419 = vunpack.c.l.b16 %v380
    %v420 = vunpack.c.l.b16 %v381
    %v421 = vunpack.c.l.b16 %v382
    %v422 = vunpack.c.l.b16 %v383
    %v423 = vunpack.c.l.b16 %v384
    %v424 = vunpack.c.l.b16 %v385
    %v425 = vunpack.c.l.b16 %v386
    %v426 = vunpack.c.l.b16 %v387
    %v427 = vpack.c.b16 %v412, %v411
    %v428 = vpack.c.b16 %v414, %v413
    %v429 = vpack.c.b16 %v416, %v415
    %v430 = vpack.c.b16 %v418, %v417
    %v431 = vpack.c.b16 %v420, %v419
    %v432 = vpack.c.b16 %v422, %v421
    %v433 = vpack.c.b16 %v424, %v423
    %v434 = vpack.c.b16 %v426, %v425
    %443 = vmatprep.subr.bf16.mxu0 0
    %444 = vmatpush1.bf16.msra.mxu0 %v427
    %445 = vmatprep.subr.bf16.mxu0 0
    %446 = vmatpush1.bf16.msra.mxu0 %v428
    %447 = vmatprep.subr.bf16.mxu0 0
    %448 = vmatpush1.bf16.msra.mxu0 %v429
    %449 = vmatprep.subr.bf16.mxu0 0
    %450 = vmatpush1.bf16.msra.mxu0 %v430
    %451 = vmatprep.subr.bf16.mxu0 0
    %452 = vmatpush1.bf16.msra.mxu0 %v431
    %453 = vmatprep.subr.bf16.mxu0 0
    %454 = vmatpush1.bf16.msra.mxu0 %v432
    %455 = vmatprep.subr.bf16.mxu0 0
    %456 = vmatpush1.bf16.msra.mxu0 %v433
    %457 = vmatprep.subr.bf16.mxu0 0
    %458 = vmatpush1.bf16.msra.mxu0 %v434
    %459 = vmatprep.subr.bf16.mxu0 0
    %460 = vmatpush1.bf16.msra.mxu0 0
    %461 = vmatprep.subr.bf16.mxu0 0
    %462 = vmatpush1.bf16.msra.mxu0 0
    %463 = vmatprep.subr.bf16.mxu0 0
    %464 = vmatpush1.bf16.msra.mxu0 0
    %465 = vmatprep.subr.bf16.mxu0 0
    %466 = vmatpush1.bf16.msra.mxu0 0
    %467 = vmatprep.subr.bf16.mxu0 0
    %468 = vmatpush1.bf16.msra.mxu0 0
    %469 = vmatprep.subr.bf16.mxu0 0
    %470 = vmatpush1.bf16.msra.mxu0 0
    %471 = vmatprep.subr.bf16.mxu0 0
    %472 = vmatpush1.bf16.msra.mxu0 0
    %473 = vmatprep.subr.bf16.mxu0 0
    %474 = vmatpush1.bf16.msra.mxu0 0
    %475 = vmatprep.mubr.bf16.mxu0 0
    %476 = vmatmul.mubr.bf16.gmra.mrb[0].mxu0 %v371
    %v477 = vpop.f32.mrb[0].mxu0
    %v478 = vadd.f32 %v393, %v477
    %v479 = vpop.f32.mrb[0].mxu0
    %v480 = vpop.f32.mrb[0].mxu0
    %v481 = vpop.f32.mrb[0].mxu0
    %482 = vdwg.mxu0
    %483 = vst [vmem:[#allocation8] sm:$0xff] %v478
    // Predicated region
    $region50: #{_qnetwork_padded_forward.1} parent=1 // pred_check
      _
    $region51: #{_qnetwork_padded_forward.1} parent=1 // pred_check_branch
      %485 = sbr.rel (0) target = $region53
    $region52: #{_qnetwork_padded_forward.1} parent=1 // pred_region
      %s487 = ssub.s32 128, 128
      %488 = vsyncadd [#allocation4], %s487
      %s490 = sshll.u32 [#allocation8], 4
      %s491 = int_to_ptr.vmem [resolvable:$true] %s490
      %493 = dma.vmem_to_hbm [thread:$0]  %s491, 128, %s9, [#allocation4]
    $region53: #{_qnetwork_padded_forward.1} parent=1 // pred_fallthru
      _
    // Predicated region
    $region54: #{_qnetwork_padded_forward.1} parent=1 // pred_check
      _
    $region55: #{_qnetwork_padded_forward.1} parent=1 // pred_check_branch
      %495 = sbr.rel (0) target = $region57
    $region56: #{_qnetwork_padded_forward.1} parent=1 // pred_region
      %496 = dma.done [#allocation4], 128
    $region57: #{_qnetwork_padded_forward.1} parent=1 // pred_fallthru
      _
    %497 = vsyncpa [#allocation3], 1
    %498 = vsyncpa [#allocation6], 1
    %499 = vsyncpa [#allocation4], 1

</llo_original>
